<compile_context>
chip_gen: v7x
topology: tpu7x:2x2x1
jax: 0.10.0
libtpu: 0.0.40
codegen_flags: <defaults>
</compile_context>

<pallas_src>
import jax
import jax.numpy as jnp
from jax.experimental import pallas as pl
from jax.experimental.pallas import tpu as pltpu


# ---------------------------------------------------------------------------
# 1) Direct HBM->HBM DMA copy (preferred path).
# ---------------------------------------------------------------------------
def _dma_copy_kernel(x_ref, o_ref, sem):
    # Whole-array HBM->HBM DMA; no VMEM bounce, no vld/vst slot usage.
    cp = pltpu.make_async_copy(x_ref, o_ref, sem)
    cp.start()
    cp.wait()


def identity(x: jax.Array) -> jax.Array:
    """Identity forward pass: returns x (bit-exact copy, same shape & dtype)."""
    if x.size == 0:
        return x
    orig_shape = x.shape
    xx = x.reshape(1) if x.ndim == 0 else x
    out = pl.pallas_call(
        _dma_copy_kernel,
        out_shape=jax.ShapeDtypeStruct(xx.shape, xx.dtype),
        in_specs=[pl.BlockSpec(memory_space=pl.ANY)],   # raw HBM ref
        out_specs=pl.BlockSpec(memory_space=pl.ANY),    # raw HBM ref
        scratch_shapes=[pltpu.SemaphoreType.DMA(())],
    )(xx)
    return out.reshape(orig_shape)


# ---------------------------------------------------------------------------
# 2) Pipelined VMEM copy (fallback path, BlockSpec auto-pipelined).
# ---------------------------------------------------------------------------
_LANE = 128
_TILE_BYTES = 4 * 1024 * 1024          # 4 MiB tiles; 2 arrays x 2 bufs = 16 MiB
_VMEM_LIMIT = 32 * 1024 * 1024         # safe on v5e/v6e (128 MiB) and v7x (64 MiB)


def _sublane_multiple(dtype) -> int:
    itemsize = jnp.dtype(dtype).itemsize
    if itemsize >= 4:
        return 8      # f32 vreg packs [8, 128]
    if itemsize == 2:
        return 16     # bf16 packs [16, 128]
    return 32         # int8 / fp8 pack [32, 128]


def _copy_kernel(x_ref, o_ref):
    o_ref[...] = x_ref[...]


def identity_pipelined(x: jax.Array) -> jax.Array:
    """Explicit double-buffered HBM->VMEM->HBM copy (lane-dense tiling)."""
    if x.size == 0:
        return x
    orig_shape = x.shape
    total = x.size

    # Lane-dense flattening: last dim a large multiple of 128 if possible.
    n = 0
    for cand in (8 * _LANE, 4 * _LANE, 2 * _LANE, _LANE):
        if total % cand == 0:
            n = cand
            break
    pad = 0
    if n == 0:
        # Guarded fallback: pad the flat array to a multiple of 1024 instead of
        # ever accepting a wide, non-128-divisible row (keeps stores lane-dense
        # and the tile footprint bounded).
        n = 8 * _LANE
        pad = (-total) % n

    flat = x.reshape(-1)
    if pad:
        flat = jnp.pad(flat, (0, pad))
    flat = flat.reshape(-1, n)
    m = flat.shape[0]

    # Row tile: ~4 MiB, rounded to the dtype's packed sublane multiple.
    sub = _sublane_multiple(flat.dtype)
    bytes_per_row = n * flat.dtype.itemsize
    tm = (_TILE_BYTES // bytes_per_row) // sub * sub
    tm = max(sub, tm)
    tm = min(tm, m)   # full extent is always legal

    out = pl.pallas_call(
        _copy_kernel,
        out_shape=jax.ShapeDtypeStruct((m, n), flat.dtype),
        grid=(pl.cdiv(m, tm),),
        in_specs=[pl.BlockSpec((tm, n), lambda i: (i, 0))],
        out_specs=pl.BlockSpec((tm, n), lambda i: (i, 0)),
        compiler_params=pltpu.CompilerParams(
            dimension_semantics=("arbitrary",),
            vmem_limit_bytes=_VMEM_LIMIT,
        ),
    )(flat)

    out = out.reshape(-1)
    if pad:
        out = out[:total]
    return out.reshape(orig_shape)


if __name__ == "__main__":
    key = jax.random.PRNGKey(0)
    # Small NCHW input consistent with a typical conv-style module.
    x = jax.random.normal(key, (2, 4, 16, 16), dtype=jnp.float32)

    # Preferred direct HBM->HBM DMA path.
    y = identity(x)
    jax.block_until_ready(y)
    assert y.shape == x.shape and y.dtype == x.dtype
    assert jnp.array_equal(y, x)

    # Fallback pipelined-copy path.
    y2 = identity_pipelined(x)
    jax.block_until_ready(y2)
    assert y2.shape == x.shape and y2.dtype == x.dtype
    assert jnp.array_equal(y2, x)

    print("KERNEL_OK")
</pallas_src>

<mosaic_0001>
module attributes {stable_mosaic.version = 11 : i64} {
  func.func @_dma_copy_kernel(%arg0: memref<2x4x16x16xf32, #tpu.memory_space<any>>, %arg1: memref<2x4x16x16xf32, #tpu.memory_space<any>>, %arg2: memref<!tpu.dma_semaphore, #tpu.memory_space<semaphore_mem>>) attributes {dimension_semantics = [], scalar_prefetch = 0 : i64, scratch_operands = 1 : i64, tpu.core_type = #tpu.core_type<tc>} {
    tpu.enqueue_dma source(%arg0 : memref<2x4x16x16xf32, #tpu.memory_space<any>>) target(%arg1 : memref<2x4x16x16xf32, #tpu.memory_space<any>>) target_semaphore(%arg2 : memref<!tpu.dma_semaphore, #tpu.memory_space<semaphore_mem>>)
    tpu.wait_dma2 semaphore(%arg2 : memref<!tpu.dma_semaphore, #tpu.memory_space<semaphore_mem>>) src(%arg0 : memref<2x4x16x16xf32, #tpu.memory_space<any>>) dst(%arg1 : memref<2x4x16x16xf32, #tpu.memory_space<any>>)
    return
  }
}

</mosaic_0001>

<llo_original>
// kernel: tpu_custom_call.1
$region0: #{tpu_custom_call.1}
  #allocation0 [shape = 'u32[]', space=smem, size = 0x4, offset = 0x4, fixed_abs, tag = 'smem constant byte address 0x4 - core index']
  #allocation1 [shape = 'u32[144,128]{1,0:T(1,128)}', space=vmem, size = 0x12000, scoped, tag = 'internal scratch']
  #allocation2 [shape = 's32[1]{0}', space=sflag, size = 0x4, scoped, tag = 'scratch operand']
  #allocation3 [shape = 's32[]', space=sflag, size = 0x4, offset = 0, fixed_abs, tag = 'sflag constant byte address 0x0 - dummy sync flag']
  #allocation4 [shape = 'u32[0]{0}', space=smem, size = 0, offset = 0, fixed_abs, tag = 'smem constant byte address 0x0 - null']
  %s0 = inlined_call_operand.hbm [shape: f32[2,4,16,16], index: 0, kind: input, shape index: {}]
  %s1 = inlined_call_operand.hbm [shape: f32[2,4,16,16], index: 1, kind: output, shape index: {}]
  %s2 = sld [smem:[#allocation0]]
  $region2: #{tpu_custom_call.1} parent=0
    _
  %s4 = ssub.s32 1, %s2
  %s5 = scalar_select 0, %s4, %s2
  %s7 = sshll.u32 1, 14
  %s8 = sxor.u32 4294967295, %s7
  %s11 = sshll.u32 3, 24
  %s12 = sxor.u32 4294967295, %s11
  %s13 = sand.u32 0, %s12
  %s15 = sor.u32 %s13, 0
  %18 = dma.general %s0, 2048, %s1, [#allocation2], [#allocation3], [#allocation4], %s15, 0
  %s19 = smul.u32 2, 4
  %s20 = smul.u32 %s19, 16
  %s21 = smul.u32 %s20, 1
  %s22 = sshll.u32 %s21, 4
  %23 = dma.done [#allocation2], %s22
  %24 = vsyncmov [#allocation2]
  %s25 = vpop.sfrf %24
  %p26 = scmp.eq.s32.totalorder %s25, 0
  %p27 = pneg %p26
  %29 = shalt.err (%p27)

</llo_original>
